<compile_context>
chip_gen: v7x
topology: tpu7x:2x2x1
jax: 0.10.0
libtpu: 0.0.40
codegen_flags: <defaults>
</compile_context>

<pallas_src>
import jax
import jax.numpy as jnp
from jax.experimental import pallas as pl
from jax.experimental.pallas import tpu as pltpu


def _fused_linear_kernel(x_ref, w_ref, b_ref, o_ref):
    # Single MXU matmul (f32 accumulate) + broadcast bias add.
    o_ref[...] = (
        jnp.dot(x_ref[...], w_ref[...], preferred_element_type=jnp.float32)
        + b_ref[...]
    ).astype(o_ref.dtype)


def fuse_params(w1, b1, w2, b2):
    """One-time algebraic fusion of the two Linear layers.

    Valid ONLY because there is no nonlinearity between them, and only when
    input_size == output_size (so the contraction dims line up).

    w1: (2*out, in)  b1: (2*out,)  w2: (out, 2*in)  b2: (out,)
    Returns (w_fused, b_fused): (in, out) and (1, out).
    """
    assert w1.shape[0] == w2.shape[1], (
        "fusion requires 2*output_size == 2*input_size "
        f"(got w1 {w1.shape}, w2 {w2.shape})"
    )
    # z = (x @ W1.T + b1) @ W2.T + b2 = x @ (W1.T @ W2.T) + (b1 @ W2.T + b2)
    w_fused = w1.T @ w2.T                       # (d_in, d_out)
    b_fused = (b1 @ w2.T + b2).reshape(1, -1)   # (1, d_out)
    return w_fused, b_fused


def _cost(B, d_in, d_out, itemsize=4):
    return pl.CostEstimate(
        flops=2 * B * d_in * d_out,
        transcendentals=0,
        bytes_accessed=itemsize * (B * d_in + d_in * d_out + d_out + B * d_out),
    )


def model_forward(x, w_fused, b_fused, *, tb=512):
    """x: (B, d_in) -> (B, d_out). Fused params come from fuse_params()."""
    B, d_in = x.shape
    d_out = w_fused.shape[1]

    # ---- Small-batch path: gridless, everything resident in VMEM. ----------
    if B <= tb or B % 8 != 0:
        return pl.pallas_call(
            _fused_linear_kernel,
            out_shape=jax.ShapeDtypeStruct((B, d_out), x.dtype),
            in_specs=[
                pl.BlockSpec(memory_space=pltpu.MemorySpace.VMEM),
                pl.BlockSpec(memory_space=pltpu.MemorySpace.VMEM),
                pl.BlockSpec(memory_space=pltpu.MemorySpace.VMEM),
            ],
            out_specs=pl.BlockSpec(memory_space=pltpu.MemorySpace.VMEM),
            cost_estimate=_cost(B, d_in, d_out, x.dtype.itemsize),
        )(x, w_fused, b_fused)

    # ---- Large-batch path: tile the batch axis, mark it parallel. ----------
    # Pick the largest tile <= tb (multiple of 8) that divides B exactly.
    tile = tb
    while tile >= 8 and B % tile != 0:
        tile //= 2
    assert tile >= 8 and B % tile == 0

    return pl.pallas_call(
        _fused_linear_kernel,
        out_shape=jax.ShapeDtypeStruct((B, d_out), x.dtype),
        grid_spec=pltpu.PrefetchScalarGridSpec(
            num_scalar_prefetch=0,
            grid=(B // tile,),
            in_specs=[
                pl.BlockSpec((tile, d_in), lambda i: (i, 0)),
                pl.BlockSpec((d_in, d_out), lambda i: (0, 0)),   # resident
                pl.BlockSpec((1, d_out), lambda i: (0, 0)),      # resident
            ],
            out_specs=pl.BlockSpec((tile, d_out), lambda i: (i, 0)),
        ),
        compiler_params=pltpu.CompilerParams(
            dimension_semantics=("parallel",),
        ),
        cost_estimate=_cost(B, d_in, d_out, x.dtype.itemsize),
    )(x, w_fused, b_fused)


if __name__ == "__main__":
    # input_size must equal output_size for the PyTorch forward to type-check.
    input_size = 32
    output_size = 32

    key = jax.random.PRNGKey(0)
    kx, kw1, kb1, kw2, kb2, kx2 = jax.random.split(key, 6)

    # Deterministic synthetic parameters (shapes match nn.Linear's weight layout).
    w1 = jax.random.normal(kw1, (output_size * 2, input_size), jnp.float32) * 0.1
    b1 = jax.random.normal(kb1, (output_size * 2,), jnp.float32) * 0.1
    w2 = jax.random.normal(kw2, (output_size, input_size * 2), jnp.float32) * 0.1
    b2 = jax.random.normal(kb2, (output_size,), jnp.float32) * 0.1

    # One-time parameter fusion (outside the forward hot path).
    w_fused, b_fused = fuse_params(w1, b1, w2, b2)
    w_fused, b_fused = jax.block_until_ready((w_fused, b_fused))

    def reference(x):
        return (x @ w1.T + b1) @ w2.T + b2

    # --- Small-batch demo (gridless VMEM path) ------------------------------
    batch = 8
    x_small = jax.random.normal(kx, (batch, input_size), dtype=jnp.float32)
    out_small = model_forward(x_small, w_fused, b_fused)
    jax.block_until_ready(out_small)
    assert out_small.shape == (batch, output_size)
    assert jnp.allclose(out_small, reference(x_small), atol=1e-4, rtol=1e-4)

    # --- Scaled batch (batch-tiled parallel grid path) ----------------------
    big_batch = 1024
    x_big = jax.random.normal(kx2, (big_batch, input_size), dtype=jnp.float32)
    out_big = model_forward(x_big, w_fused, b_fused, tb=256)
    jax.block_until_ready(out_big)
    assert out_big.shape == (big_batch, output_size)
    assert jnp.allclose(out_big, reference(x_big), atol=1e-4, rtol=1e-4)

    print("KERNEL_OK")
</pallas_src>

<mosaic_0001>
module attributes {stable_mosaic.version = 11 : i64} {
  func.func @_fused_linear_kernel(%arg0: memref<8x32xf32, #tpu.memory_space<vmem>>, %arg1: memref<32x32xf32, #tpu.memory_space<vmem>>, %arg2: memref<1x32xf32, #tpu.memory_space<vmem>>, %arg3: memref<8x32xf32, #tpu.memory_space<vmem>>) attributes {dimension_semantics = [], scalar_prefetch = 0 : i64, scratch_operands = 0 : i64, tpu.core_type = #tpu.core_type<tc>} {
    %c0 = arith.constant 0 : index
    %c0_0 = arith.constant 0 : index
    %0 = vector.load %arg0[%c0, %c0_0] : memref<8x32xf32, #tpu.memory_space<vmem>>, vector<8x32xf32>
    %c0_1 = arith.constant 0 : index
    %c0_2 = arith.constant 0 : index
    %1 = vector.load %arg1[%c0_1, %c0_2] : memref<32x32xf32, #tpu.memory_space<vmem>>, vector<32x32xf32>
    %cst = arith.constant dense<0.000000e+00> : vector<8x32xf32>
    %2 = tpu.matmul %0, %1, %cst {dimension_numbers = #tpu.dot_dimension_numbers<[1], [0], [0], [1], [0, 0, 1, 1], [], []>} : vector<8x32xf32>, vector<32x32xf32>, vector<8x32xf32> -> vector<8x32xf32>
    %c0_3 = arith.constant 0 : index
    %c0_4 = arith.constant 0 : index
    %3 = vector.load %arg2[%c0_3, %c0_4] : memref<1x32xf32, #tpu.memory_space<vmem>>, vector<1x32xf32>
    %4 = vector.broadcast %3 : vector<1x32xf32> to vector<8x32xf32>
    %5 = arith.addf %2, %4 : vector<8x32xf32>
    %c0_5 = arith.constant 0 : index
    %c0_6 = arith.constant 0 : index
    %6 = vector.load %arg3[%c0_5, %c0_6] : memref<8x32xf32, #tpu.memory_space<vmem>>, vector<8x32xf32>
    tpu.vector_store %arg3[%c0_5, %c0_6], %5 {strides = array<i32>} : memref<8x32xf32, #tpu.memory_space<vmem>>, vector<8x32xf32>,
    return
  }
}

</mosaic_0001>

<llo_original>
// kernel: tpu_custom_call.1
$region0: #{tpu_custom_call.1}
  #allocation0 [shape = 'u32[]', space=smem, size = 0x4, offset = 0x4, fixed_abs, tag = 'smem constant byte address 0x4 - core index']
  #allocation1 [shape = 'u32[144,128]{1,0:T(1,128)}', space=vmem, size = 0x12000, scoped, tag = 'internal scratch']
  %s0 = inlined_call_operand.hbm [shape: f32[8,32], index: 0, kind: input, shape index: {}]
  %s1 = inlined_call_operand.hbm [shape: f32[32,32], index: 1, kind: input, shape index: {}]
  %s2 = inlined_call_operand.vmem [shape: f32[1,32], index: 2, kind: input, shape index: {}]
  %s3 = inlined_call_operand.hbm [shape: f32[8,32], index: 3, kind: output, shape index: {}]
  %s4 = sld [smem:[#allocation0]]
  $region30: #{tpu_custom_call.1} parent=0
    _
  %s6 = ssub.s32 1, %s4
  %s7 = scalar_select 0, %s6, %s4
  $region1: #{tpu_custom_call.1} parent=0
    #allocation2 [shape = 'u8[4096]{0}', space=vmem, size = 0x1000, scoped, tag = 'input window, operand 0, single buffered']
    #allocation3 [shape = 's32[1]{0}', space=sflag, size = 0x4, scoped, tag = 'scoped memory for tpu_custom_call.1']
    #allocation4 [shape = 's32[1]{0}', space=sflag, size = 0x4, scoped, tag = 'scoped memory for tpu_custom_call.1']
    #allocation5 [shape = 'u8[16384]{0}', space=vmem, size = 0x4000, scoped, tag = 'input window, operand 1, single buffered']
    #allocation6 [shape = 's32[1]{0}', space=sflag, size = 0x4, scoped, tag = 'scoped memory for tpu_custom_call.1']
    #allocation7 [shape = 'u8[4096]{0}', space=vmem, size = 0x1000, scoped, tag = 'output window, operand 0, single buffered']
    %8 = vsyncpa [#allocation3], 0
    %9 = vsyncpa [#allocation6], 0
    %10 = vsyncpa [#allocation4], 0
    // Predicated region
    $region2: #{tpu_custom_call.1} parent=1 // pred_check
      _
    $region3: #{tpu_custom_call.1} parent=1 // pred_check_branch
      %12 = sbr.rel (0) target = $region5
    $region4: #{tpu_custom_call.1} parent=1 // pred_region
      %s14 = ssub.s32 128, 128
      %15 = vsyncadd [#allocation3], %s14
      %s17 = sshll.u32 [#allocation2], 4
      %s18 = int_to_ptr.vmem [resolvable:$true] %s17
      %20 = dma.hbm_to_vmem [thread:$0]  %s0, 128, %s18, [#allocation3]
    $region5: #{tpu_custom_call.1} parent=1 // pred_fallthru
      _
    // Predicated region
    $region6: #{tpu_custom_call.1} parent=1 // pred_check
      _
    $region7: #{tpu_custom_call.1} parent=1 // pred_check_branch
      %22 = sbr.rel (0) target = $region9
    $region8: #{tpu_custom_call.1} parent=1 // pred_region
      %s24 = ssub.s32 512, 512
      %25 = vsyncadd [#allocation6], %s24
      %s26 = sshll.u32 [#allocation5], 4
      %s27 = int_to_ptr.vmem [resolvable:$true] %s26
      %32 = dma.hbm_to_vmem [thread:$0]  %s1, 512, %s27, [#allocation6], 128, 128, 8
    $region9: #{tpu_custom_call.1} parent=1 // pred_fallthru
      _
    // Predicated region
    $region10: #{tpu_custom_call.1} parent=1 // pred_check
      _
    $region11: #{tpu_custom_call.1} parent=1 // pred_check_branch
      %34 = sbr.rel (0) target = $region13
    $region12: #{tpu_custom_call.1} parent=1 // pred_region
      _
    $region13: #{tpu_custom_call.1} parent=1 // pred_fallthru
      _
    // Predicated region
    $region14: #{tpu_custom_call.1} parent=1 // pred_check
      _
    $region15: #{tpu_custom_call.1} parent=1 // pred_check_branch
      %36 = sbr.rel (0) target = $region17
    $region16: #{tpu_custom_call.1} parent=1 // pred_region
      %37 = dma.done [#allocation3], 128
    $region17: #{tpu_custom_call.1} parent=1 // pred_fallthru
      _
    // Predicated region
    $region18: #{tpu_custom_call.1} parent=1 // pred_check
      _
    $region19: #{tpu_custom_call.1} parent=1 // pred_check_branch
      %39 = sbr.rel (0) target = $region21
    $region20: #{tpu_custom_call.1} parent=1 // pred_region
      %40 = dma.done [#allocation6], 512
    $region21: #{tpu_custom_call.1} parent=1 // pred_fallthru
      _
    %v41 = vld [vmem:[#allocation2] sm:$0xff]
    %v42 = vld [vmem:[#allocation5] sm:$0xff]
    %v43 = vld [vmem:[#allocation5 + $0x8] sm:$0xff]
    %v44 = vld [vmem:[#allocation5 + $0x10] sm:$0xff]
    %v45 = vld [vmem:[#allocation5 + $0x18] sm:$0xff]
    %v46 = vld [vmem:[%s2] sm:$0x1]
    %v48 = vlaneseq
    %v49 = vshrl.u32 %v48, 7
    %v50 = vsub.s32 0, %v49
    %v51 = vrot.slane %v46, %v50
    %vm53 = vcmask 261120
    %v55 = vsel %vm53, %v41, 0
    %57 = vmatprep.subr.mxu0 0.0
    %58 = vmatpush1.msra.mxu0 %v42
    %59 = vmatprep.subr.mxu0 0.0
    %60 = vmatpush1.msra.mxu0 %v43
    %61 = vmatprep.subr.mxu0 0.0
    %62 = vmatpush1.msra.mxu0 %v44
    %63 = vmatprep.subr.mxu0 0.0
    %64 = vmatpush1.msra.mxu0 %v45
    %65 = vmatprep.subr.mxu0 0.0
    %66 = vmatpush1.msra.mxu0 0.0
    %67 = vmatprep.subr.mxu0 0.0
    %68 = vmatpush1.msra.mxu0 0.0
    %69 = vmatprep.subr.mxu0 0.0
    %70 = vmatpush1.msra.mxu0 0.0
    %71 = vmatprep.subr.mxu0 0.0
    %72 = vmatpush1.msra.mxu0 0.0
    %73 = vmatprep.subr.mxu0 0.0
    %74 = vmatpush1.msra.mxu0 0.0
    %75 = vmatprep.subr.mxu0 0.0
    %76 = vmatpush1.msra.mxu0 0.0
    %77 = vmatprep.subr.mxu0 0.0
    %78 = vmatpush1.msra.mxu0 0.0
    %79 = vmatprep.subr.mxu0 0.0
    %80 = vmatpush1.msra.mxu0 0.0
    %81 = vmatprep.subr.mxu0 0.0
    %82 = vmatpush1.msra.mxu0 0.0
    %83 = vmatprep.subr.mxu0 0.0
    %84 = vmatpush1.msra.mxu0 0.0
    %85 = vmatprep.subr.mxu0 0.0
    %86 = vmatpush1.msra.mxu0 0.0
    %87 = vmatprep.subr.mxu0 0.0
    %88 = vmatpush1.msra.mxu0 0.0
    %89 = vmatprep.subr.mxu0 0.0
    %90 = vmatpush1.msra.mxu0 0.0
    %91 = vmatprep.subr.mxu0 0.0
    %92 = vmatpush1.msra.mxu0 0.0
    %93 = vmatprep.subr.mxu0 0.0
    %94 = vmatpush1.msra.mxu0 0.0
    %95 = vmatprep.subr.mxu0 0.0
    %96 = vmatpush1.msra.mxu0 0.0
    %97 = vmatprep.subr.mxu0 0.0
    %98 = vmatpush1.msra.mxu0 0.0
    %99 = vmatprep.subr.mxu0 0.0
    %100 = vmatpush1.msra.mxu0 0.0
    %101 = vmatprep.subr.mxu0 0.0
    %102 = vmatpush1.msra.mxu0 0.0
    %103 = vmatprep.subr.mxu0 0.0
    %104 = vmatpush1.msra.mxu0 0.0
    %105 = vmatprep.subr.mxu0 0.0
    %106 = vmatpush1.msra.mxu0 0.0
    %107 = vmatprep.subr.mxu0 0.0
    %108 = vmatpush1.msra.mxu0 0.0
    %109 = vmatprep.subr.mxu0 0.0
    %110 = vmatpush1.msra.mxu0 0.0
    %111 = vmatprep.subr.mxu0 0.0
    %112 = vmatpush1.msra.mxu0 0.0
    %113 = vmatprep.subr.mxu0 0.0
    %114 = vmatpush1.msra.mxu0 0.0
    %115 = vmatprep.subr.mxu0 0.0
    %116 = vmatpush1.msra.mxu0 0.0
    %117 = vmatprep.subr.mxu0 0.0
    %118 = vmatpush1.msra.mxu0 0.0
    %119 = vmatprep.subr.mxu0 0.0
    %120 = vmatpush1.msra.mxu0 0.0
    %121 = vmatprep.mubr.f32.mxu0 0.0
    %122 = vmatmul.mubr.f32.gmra.mrb[0].mxu0 %v55
    %v123 = vpop.f32.mrb[0].mxu0
    %v124 = vadd.f32 %v51, %v123
    %v125 = vpop.f32.mrb[0].mxu0
    %126 = vdwg.mxu0
    %127 = vst.msk [vmem:[#allocation7] sm:$0xff] %vm53, %v124
    // Predicated region
    $region22: #{tpu_custom_call.1} parent=1 // pred_check
      _
    $region23: #{tpu_custom_call.1} parent=1 // pred_check_branch
      %129 = sbr.rel (0) target = $region25
    $region24: #{tpu_custom_call.1} parent=1 // pred_region
      %s131 = ssub.s32 128, 128
      %132 = vsyncadd [#allocation4], %s131
      %s134 = sshll.u32 [#allocation7], 4
      %s135 = int_to_ptr.vmem [resolvable:$true] %s134
      %137 = dma.vmem_to_hbm [thread:$0]  %s135, 128, %s3, [#allocation4]
    $region25: #{tpu_custom_call.1} parent=1 // pred_fallthru
      _
    // Predicated region
    $region26: #{tpu_custom_call.1} parent=1 // pred_check
      _
    $region27: #{tpu_custom_call.1} parent=1 // pred_check_branch
      %139 = sbr.rel (0) target = $region29
    $region28: #{tpu_custom_call.1} parent=1 // pred_region
      %140 = dma.done [#allocation4], 128
    $region29: #{tpu_custom_call.1} parent=1 // pred_fallthru
      _
    %141 = vsyncpa [#allocation3], 1
    %142 = vsyncpa [#allocation6], 1
    %143 = vsyncpa [#allocation4], 1

</llo_original>
